<compile_context>
chip_gen: v5e
topology: v5e:2x2
jax: 0.10.0
libtpu: 0.0.40
codegen_flags: <defaults>
</compile_context>

<pallas_src>
import math

import jax
import jax.numpy as jnp
from jax import lax
from jax.experimental import pallas as pl
from jax.experimental.pallas import tpu as pltpu


def _bilstm_kernel(x_ref, wih_ref, whh_ref, b_ref, out_ref, xp_ref):
    """Fused bidirectional LSTM recurrence, fully resident in VMEM.

    x_ref:   (T, B, 2C)  bf16, row t = [x[t] | x[T-1-t]] along lanes
    wih_ref: (2C, 8H)    bf16, columns [i_f i_b f_f f_b g_f g_b o_f o_b]
                               rows 0:C -> forward cols only, rows C:2C -> backward cols only
    whh_ref: (2H, 8H)    bf16, block-diagonal recurrent weight in the same column layout
    b_ref:   (1, 8H)     f32,  combined (b_ih + b_hh) per direction, interleaved
    out_ref: (T, B, 2H)  f32,  out[s, :, :H] = fwd hidden at time s
                               out[s, :, H:] = bwd hidden at time T-1-s (flip in wrapper)
    xp_ref:  (T, B, 8H)  f32 scratch -- fused precomputed input projections.
    """
    T, B, _ = x_ref.shape
    H2 = out_ref.shape[-1]            # 2H
    H8 = xp_ref.shape[-1]             # 8H
    H = H2 // 2

    # ---- Single hoisted input-projection MXU pass for BOTH directions, bias folded in.
    contract = (((2,), (0,)), ((), ()))        # contract 2C; T, B stay free
    xp_ref[...] = lax.dot_general(
        x_ref[...], wih_ref[...], contract,
        preferred_element_type=jnp.float32) + b_ref[...]

    # Recurrent block-diagonal weight loaded once (bf16 MXU operand).
    whh = whh_ref[...]

    # Hoisted lane mask: g-gate blocks (lanes 4H:6H) use tanh, i/f/o use sigmoid.
    lane = lax.broadcasted_iota(jnp.int32, (B, H8), 1)
    is_g = jnp.logical_and(lane >= 4 * H, lane < 6 * H)
    half = jnp.float32(0.5)

    def step(s, carry):
        h, c = carry                                   # (B, 2H) f32, [fwd | bwd] lanes
        # One fused recurrent dot for both directions on the latency-bound chain.
        pre = xp_ref[s] + jnp.dot(h.astype(jnp.bfloat16), whh,
                                  preferred_element_type=jnp.float32)   # (B, 8H) f32
        # Single EUP pass over the whole slab: sigmoid(x) = 0.5*tanh(0.5*x) + 0.5.
        z = jnp.tanh(jnp.where(is_g, pre, pre * half))
        act = jnp.where(is_g, z, z * half + half)
        i = act[:, 0 * H2:1 * H2]                      # (B, 2H) contiguous gate slabs
        f = act[:, 1 * H2:2 * H2]
        g = act[:, 2 * H2:3 * H2]
        o = act[:, 3 * H2:4 * H2]
        c_new = f * c + i * g                          # f32 cell state
        h_new = o * jnp.tanh(c_new)
        out_ref[s] = h_new                             # one lane-contiguous store per step
        return h_new, c_new

    zeros = jnp.zeros((B, H2), jnp.float32)
    # Full unroll only for small static T (LLO cross-step visibility); partial otherwise
    # to bound instruction memory / vreg pressure.
    unroll = True if T <= 32 else 4
    lax.fori_loop(0, T, step, (zeros, zeros), unroll=unroll)


def lstm_forward(x, params, is_generator=True):
    """JAX/Pallas equivalent of TEGAN_TS.LSTM.forward.

    x: (B, C, T) float32 (PyTorch layout).
    Requires hidden_size == C (implied by the module's reshape to (-1, 1, 2*T*C)).
    """
    b, c, T = x.shape
    H = params["whh_f"].shape[0]
    assert H == c, "module's reshape requires hidden_size == input channels"
    H2, H8 = 2 * H, 8 * H

    # torch .view(-1, T, c): pure row-major reinterpretation, NOT a transpose.
    # (Faithful to the reference; do not "fix" this into a transpose.)
    x_btc = x.reshape(b, T, c)
    x_tbc = jnp.transpose(x_btc, (1, 0, 2))                      # (T, B, C)
    # Augment with the time-reversed copy so ONE matmul yields both directions'
    # projections already aligned to the loop step index.
    x_aug = jnp.concatenate([x_tbc, x_tbc[::-1]], axis=-1).astype(jnp.bfloat16)  # (T,B,2C)

    def interleave(wf, wb):
        # (.., 4H) x2 -> (.., 8H) with column blocks [i_f i_b f_f f_b g_f g_b o_f o_b]
        blocks = []
        for gi in range(4):
            blocks.append(wf[..., gi * H:(gi + 1) * H])
            blocks.append(wb[..., gi * H:(gi + 1) * H])
        return jnp.concatenate(blocks, axis=-1)

    zC = jnp.zeros((c, 4 * H), jnp.float32)
    zH = jnp.zeros((H, 4 * H), jnp.float32)
    # (2C, 8H): top rows project x[t] into forward columns, bottom rows project
    # x[T-1-t] into backward columns.
    wih_aug = jnp.concatenate([interleave(params["wih_f"], zC),
                               interleave(zC, params["wih_b"])],
                              axis=0).astype(jnp.bfloat16)
    # (2H, 8H) block-diagonal recurrent weight matching h = [h_f | h_b].
    whh_blk = jnp.concatenate([interleave(params["whh_f"], zH),
                               interleave(zH, params["whh_b"])],
                              axis=0).astype(jnp.bfloat16)
    b_aug = interleave(params["b_f"], params["b_b"])             # (1, 8H) f32

    # VMEM footprint -> scoped limit (defaults: 16 MiB v5e / 32 MiB v6e,v7x).
    vmem_bytes = (x_aug.size * 2 + wih_aug.size * 2 + whh_blk.size * 2
                  + b_aug.size * 4 + T * b * H2 * 4 + T * b * H8 * 4)
    vmem_limit = int(min(max(2 * vmem_bytes + (4 << 20), 32 << 20), 64 << 20))

    vmem = pl.BlockSpec(memory_space=pltpu.MemorySpace.VMEM)
    r_out_tbh = pl.pallas_call(
        _bilstm_kernel,
        out_shape=jax.ShapeDtypeStruct((T, b, H2), jnp.float32),
        in_specs=[vmem] * 4,
        out_specs=vmem,
        scratch_shapes=[pltpu.VMEM((T, b, H8), jnp.float32)],
        compiler_params=pltpu.CompilerParams(vmem_limit_bytes=vmem_limit),
    )(x_aug, wih_aug, whh_blk, b_aug)

    # Forward half already time-aligned; backward half stored in computation order
    # (step s == actual time T-1-s) -> flip here, then concat and go batch-major.
    h_fwd = r_out_tbh[:, :, :H]
    h_bwd = r_out_tbh[::-1, :, H:]
    r_out = jnp.transpose(jnp.concatenate([h_fwd, h_bwd], axis=-1), (1, 0, 2))  # (B,T,2H)

    out = r_out.reshape(b, 1, 2 * T * c)
    if is_generator:
        # AvgPool1d(kernel_size=2, stride=2) over the flat last dim
        # (averages adjacent hidden channels -- faithful to the reference).
        out = out.reshape(b, 1, T * c, 2).mean(axis=-1)
    return out


if __name__ == "__main__":
    B, C, T = 2, 32, 8          # batch, channels (=input_size=hidden_size), seq len
    H = C

    key = jax.random.PRNGKey(0)
    kx, k0, k1, k2, k3, k4, k5 = jax.random.split(key, 7)
    scale = 1.0 / math.sqrt(H)  # torch nn.LSTM default init: U(-1/sqrt(H), 1/sqrt(H))

    def u(k, shape):
        return jax.random.uniform(k, shape, jnp.float32, -scale, scale)

    params = {
        # forward direction (weight_ih_l0.T, weight_hh_l0.T, b_ih + b_hh)
        "wih_f": u(k0, (C, 4 * H)),
        "whh_f": u(k1, (H, 4 * H)),
        "b_f":   u(k2, (1, 4 * H)),
        # reverse direction (weight_ih_l0_reverse.T, ...)
        "wih_b": u(k3, (C, 4 * H)),
        "whh_b": u(k4, (H, 4 * H)),
        "b_b":   u(k5, (1, 4 * H)),
    }

    x = jax.random.normal(kx, (B, C, T), jnp.float32)

    out = lstm_forward(x, params, is_generator=True)
    jax.block_until_ready(out)
    assert out.shape == (B, 1, T * C), out.shape
    assert bool(jnp.all(jnp.isfinite(out))), "non-finite output"
    print("KERNEL_OK")
</pallas_src>

<mosaic_0001>
module attributes {stable_mosaic.version = 11 : i64} {
  func.func @_bilstm_kernel(%arg0: memref<8x2x64xbf16, #tpu.memory_space<vmem>>, %arg1: memref<64x256xbf16, #tpu.memory_space<vmem>>, %arg2: memref<64x256xbf16, #tpu.memory_space<vmem>>, %arg3: memref<1x256xf32, #tpu.memory_space<vmem>>, %arg4: memref<8x2x64xf32, #tpu.memory_space<vmem>>, %arg5: memref<8x2x256xf32, #tpu.memory_space<vmem>>) attributes {dimension_semantics = [], scalar_prefetch = 0 : i64, scratch_operands = 1 : i64, tpu.core_type = #tpu.core_type<tc>} {
    %c0 = arith.constant 0 : index
    %c0_0 = arith.constant 0 : index
    %c0_1 = arith.constant 0 : index
    %0 = vector.load %arg0[%c0, %c0_0, %c0_1] : memref<8x2x64xbf16, #tpu.memory_space<vmem>>, vector<8x2x64xbf16>
    %c0_2 = arith.constant 0 : index
    %c0_3 = arith.constant 0 : index
    %1 = vector.load %arg1[%c0_2, %c0_3] : memref<64x256xbf16, #tpu.memory_space<vmem>>, vector<64x256xbf16>
    %cst = arith.constant dense<0.000000e+00> : vector<8x2x256xf32>
    %2 = tpu.matmul %0, %1, %cst {dimension_numbers = #tpu.dot_dimension_numbers<[2], [0], [0, 1], [1], [0, 0, 0, 1, 1, 1], [], []>} : vector<8x2x64xbf16>, vector<64x256xbf16>, vector<8x2x256xf32> -> vector<8x2x256xf32>
    %c0_4 = arith.constant 0 : index
    %c0_5 = arith.constant 0 : index
    %3 = vector.load %arg3[%c0_4, %c0_5] : memref<1x256xf32, #tpu.memory_space<vmem>>, vector<1x256xf32>
    %4 = vector.shape_cast %3 : vector<1x256xf32> to vector<1x1x256xf32>
    %5 = vector.broadcast %4 : vector<1x1x256xf32> to vector<8x2x256xf32>
    %6 = arith.addf %2, %5 : vector<8x2x256xf32>
    %c0_6 = arith.constant 0 : index
    %c0_7 = arith.constant 0 : index
    %c0_8 = arith.constant 0 : index
    %7 = vector.load %arg5[%c0_6, %c0_7, %c0_8] : memref<8x2x256xf32, #tpu.memory_space<vmem>>, vector<8x2x256xf32>
    tpu.vector_store %arg5[%c0_6, %c0_7, %c0_8], %6 {strides = array<i32>} : memref<8x2x256xf32, #tpu.memory_space<vmem>>, vector<8x2x256xf32>,
    %c0_9 = arith.constant 0 : index
    %c0_10 = arith.constant 0 : index
    %8 = vector.load %arg2[%c0_9, %c0_10] : memref<64x256xbf16, #tpu.memory_space<vmem>>, vector<64x256xbf16>
    %9 = tpu.iota {dimensions = array<i32: 1>} : vector<2x256xi32>
    %c128_i32 = arith.constant 128 : i32
    %10 = vector.broadcast %c128_i32 : i32 to vector<2x256xi32>
    %11 = arith.cmpi sge, %9, %10 : vector<2x256xi32>
    %c192_i32 = arith.constant 192 : i32
    %12 = vector.broadcast %c192_i32 : i32 to vector<2x256xi32>
    %13 = arith.cmpi slt, %9, %12 : vector<2x256xi32>
    %14 = arith.andi %11, %13 : vector<2x256xi1>
    %cst_11 = arith.constant 0.000000e+00 : f32
    %15 = vector.broadcast %cst_11 : f32 to vector<2x64xf32>
    %cst_12 = arith.constant 5.000000e-01 : f32
    %c0_i32 = arith.constant 0 : i32
    %16 = arith.index_cast %c0_i32 : i32 to index
    %c0_13 = arith.constant 0 : index
    %c0_14 = arith.constant 0 : index
    %17 = vector.load %arg5[%16, %c0_13, %c0_14] : memref<8x2x256xf32, #tpu.memory_space<vmem>>, vector<1x2x256xf32>
    %18 = vector.shape_cast %17 : vector<1x2x256xf32> to vector<2x256xf32>
    %19 = arith.truncf %15 : vector<2x64xf32> to vector<2x64xbf16>
    %cst_15 = arith.constant dense<0.000000e+00> : vector<2x256xf32>
    %20 = tpu.matmul %19, %8, %cst_15 {dimension_numbers = #tpu.dot_dimension_numbers<[1], [0], [0], [1], [0, 0, 1, 1], [], []>} : vector<2x64xbf16>, vector<64x256xbf16>, vector<2x256xf32> -> vector<2x256xf32>
    %21 = arith.addf %18, %20 : vector<2x256xf32>
    %22 = vector.broadcast %cst_12 : f32 to vector<2x256xf32>
    %23 = arith.mulf %21, %22 : vector<2x256xf32>
    %24 = arith.select %14, %21, %23 : vector<2x256xi1>, vector<2x256xf32>
    %25 = math.tanh %24 : vector<2x256xf32>
    %26 = vector.broadcast %cst_12 : f32 to vector<2x256xf32>
    %27 = arith.mulf %25, %26 : vector<2x256xf32>
    %28 = vector.broadcast %cst_12 : f32 to vector<2x256xf32>
    %29 = arith.addf %27, %28 : vector<2x256xf32>
    %30 = arith.select %14, %25, %29 : vector<2x256xi1>, vector<2x256xf32>
    %31 = vector.extract_strided_slice %30 {offsets = [0, 0], sizes = [2, 64], strides = [1, 1]} : vector<2x256xf32> to vector<2x64xf32>
    %32 = vector.extract_strided_slice %30 {offsets = [0, 64], sizes = [2, 64], strides = [1, 1]} : vector<2x256xf32> to vector<2x64xf32>
    %33 = vector.extract_strided_slice %30 {offsets = [0, 128], sizes = [2, 64], strides = [1, 1]} : vector<2x256xf32> to vector<2x64xf32>
    %34 = vector.extract_strided_slice %30 {offsets = [0, 192], sizes = [2, 64], strides = [1, 1]} : vector<2x256xf32> to vector<2x64xf32>
    %35 = arith.mulf %32, %15 : vector<2x64xf32>
    %36 = arith.mulf %31, %33 : vector<2x64xf32>
    %37 = arith.addf %35, %36 : vector<2x64xf32>
    %38 = math.tanh %37 : vector<2x64xf32>
    %39 = arith.mulf %34, %38 : vector<2x64xf32>
    %40 = arith.index_cast %c0_i32 : i32 to index
    %c0_16 = arith.constant 0 : index
    %c0_17 = arith.constant 0 : index
    %41 = vector.load %arg4[%40, %c0_16, %c0_17] : memref<8x2x64xf32, #tpu.memory_space<vmem>>, vector<1x2x64xf32>
    %42 = vector.shape_cast %41 : vector<1x2x64xf32> to vector<2x64xf32>
    %43 = vector.shape_cast %39 : vector<2x64xf32> to vector<1x2x64xf32>
    tpu.vector_store %arg4[%40, %c0_16, %c0_17], %43 {strides = array<i32>} : memref<8x2x64xf32, #tpu.memory_space<vmem>>, vector<1x2x64xf32>,
    %c1_i32 = arith.constant 1 : i32
    %44 = arith.index_cast %c1_i32 : i32 to index
    %c0_18 = arith.constant 0 : index
    %c0_19 = arith.constant 0 : index
    %45 = vector.load %arg5[%44, %c0_18, %c0_19] : memref<8x2x256xf32, #tpu.memory_space<vmem>>, vector<1x2x256xf32>
    %46 = vector.shape_cast %45 : vector<1x2x256xf32> to vector<2x256xf32>
    %47 = arith.truncf %39 : vector<2x64xf32> to vector<2x64xbf16>
    %cst_20 = arith.constant dense<0.000000e+00> : vector<2x256xf32>
    %48 = tpu.matmul %47, %8, %cst_20 {dimension_numbers = #tpu.dot_dimension_numbers<[1], [0], [0], [1], [0, 0, 1, 1], [], []>} : vector<2x64xbf16>, vector<64x256xbf16>, vector<2x256xf32> -> vector<2x256xf32>
    %49 = arith.addf %46, %48 : vector<2x256xf32>
    %50 = vector.broadcast %cst_12 : f32 to vector<2x256xf32>
    %51 = arith.mulf %49, %50 : vector<2x256xf32>
    %52 = arith.select %14, %49, %51 : vector<2x256xi1>, vector<2x256xf32>
    %53 = math.tanh %52 : vector<2x256xf32>
    %54 = vector.broadcast %cst_12 : f32 to vector<2x256xf32>
    %55 = arith.mulf %53, %54 : vector<2x256xf32>
    %56 = vector.broadcast %cst_12 : f32 to vector<2x256xf32>
    %57 = arith.addf %55, %56 : vector<2x256xf32>
    %58 = arith.select %14, %53, %57 : vector<2x256xi1>, vector<2x256xf32>
    %59 = vector.extract_strided_slice %58 {offsets = [0, 0], sizes = [2, 64], strides = [1, 1]} : vector<2x256xf32> to vector<2x64xf32>
    %60 = vector.extract_strided_slice %58 {offsets = [0, 64], sizes = [2, 64], strides = [1, 1]} : vector<2x256xf32> to vector<2x64xf32>
    %61 = vector.extract_strided_slice %58 {offsets = [0, 128], sizes = [2, 64], strides = [1, 1]} : vector<2x256xf32> to vector<2x64xf32>
    %62 = vector.extract_strided_slice %58 {offsets = [0, 192], sizes = [2, 64], strides = [1, 1]} : vector<2x256xf32> to vector<2x64xf32>
    %63 = arith.mulf %60, %37 : vector<2x64xf32>
    %64 = arith.mulf %59, %61 : vector<2x64xf32>
    %65 = arith.addf %63, %64 : vector<2x64xf32>
    %66 = math.tanh %65 : vector<2x64xf32>
    %67 = arith.mulf %62, %66 : vector<2x64xf32>
    %68 = arith.index_cast %c1_i32 : i32 to index
    %c0_21 = arith.constant 0 : index
    %c0_22 = arith.constant 0 : index
    %69 = vector.load %arg4[%68, %c0_21, %c0_22] : memref<8x2x64xf32, #tpu.memory_space<vmem>>, vector<1x2x64xf32>
    %70 = vector.shape_cast %69 : vector<1x2x64xf32> to vector<2x64xf32>
    %71 = vector.shape_cast %67 : vector<2x64xf32> to vector<1x2x64xf32>
    tpu.vector_store %arg4[%68, %c0_21, %c0_22], %71 {strides = array<i32>} : memref<8x2x64xf32, #tpu.memory_space<vmem>>, vector<1x2x64xf32>,
    %c2_i32 = arith.constant 2 : i32
    %72 = arith.index_cast %c2_i32 : i32 to index
    %c0_23 = arith.constant 0 : index
    %c0_24 = arith.constant 0 : index
    %73 = vector.load %arg5[%72, %c0_23, %c0_24] : memref<8x2x256xf32, #tpu.memory_space<vmem>>, vector<1x2x256xf32>
    %74 = vector.shape_cast %73 : vector<1x2x256xf32> to vector<2x256xf32>
    %75 = arith.truncf %67 : vector<2x64xf32> to vector<2x64xbf16>
    %cst_25 = arith.constant dense<0.000000e+00> : vector<2x256xf32>
    %76 = tpu.matmul %75, %8, %cst_25 {dimension_numbers = #tpu.dot_dimension_numbers<[1], [0], [0], [1], [0, 0, 1, 1], [], []>} : vector<2x64xbf16>, vector<64x256xbf16>, vector<2x256xf32> -> vector<2x256xf32>
    %77 = arith.addf %74, %76 : vector<2x256xf32>
    %78 = vector.broadcast %cst_12 : f32 to vector<2x256xf32>
    %79 = arith.mulf %77, %78 : vector<2x256xf32>
    %80 = arith.select %14, %77, %79 : vector<2x256xi1>, vector<2x256xf32>
    %81 = math.tanh %80 : vector<2x256xf32>
    %82 = vector.broadcast %cst_12 : f32 to vector<2x256xf32>
    %83 = arith.mulf %81, %82 : vector<2x256xf32>
    %84 = vector.broadcast %cst_12 : f32 to vector<2x256xf32>
    %85 = arith.addf %83, %84 : vector<2x256xf32>
    %86 = arith.select %14, %81, %85 : vector<2x256xi1>, vector<2x256xf32>
    %87 = vector.extract_strided_slice %86 {offsets = [0, 0], sizes = [2, 64], strides = [1, 1]} : vector<2x256xf32> to vector<2x64xf32>
    %88 = vector.extract_strided_slice %86 {offsets = [0, 64], sizes = [2, 64], strides = [1, 1]} : vector<2x256xf32> to vector<2x64xf32>
    %89 = vector.extract_strided_slice %86 {offsets = [0, 128], sizes = [2, 64], strides = [1, 1]} : vector<2x256xf32> to vector<2x64xf32>
    %90 = vector.extract_strided_slice %86 {offsets = [0, 192], sizes = [2, 64], strides = [1, 1]} : vector<2x256xf32> to vector<2x64xf32>
    %91 = arith.mulf %88, %65 : vector<2x64xf32>
    %92 = arith.mulf %87, %89 : vector<2x64xf32>
    %93 = arith.addf %91, %92 : vector<2x64xf32>
    %94 = math.tanh %93 : vector<2x64xf32>
    %95 = arith.mulf %90, %94 : vector<2x64xf32>
    %96 = arith.index_cast %c2_i32 : i32 to index
    %c0_26 = arith.constant 0 : index
    %c0_27 = arith.constant 0 : index
    %97 = vector.load %arg4[%96, %c0_26, %c0_27] : memref<8x2x64xf32, #tpu.memory_space<vmem>>, vector<1x2x64xf32>
    %98 = vector.shape_cast %97 : vector<1x2x64xf32> to vector<2x64xf32>
    %99 = vector.shape_cast %95 : vector<2x64xf32> to vector<1x2x64xf32>
    tpu.vector_store %arg4[%96, %c0_26, %c0_27], %99 {strides = array<i32>} : memref<8x2x64xf32, #tpu.memory_space<vmem>>, vector<1x2x64xf32>,
    %c3_i32 = arith.constant 3 : i32
    %100 = arith.index_cast %c3_i32 : i32 to index
    %c0_28 = arith.constant 0 : index
    %c0_29 = arith.constant 0 : index
    %101 = vector.load %arg5[%100, %c0_28, %c0_29] : memref<8x2x256xf32, #tpu.memory_space<vmem>>, vector<1x2x256xf32>
    %102 = vector.shape_cast %101 : vector<1x2x256xf32> to vector<2x256xf32>
    %103 = arith.truncf %95 : vector<2x64xf32> to vector<2x64xbf16>
    %cst_30 = arith.constant dense<0.000000e+00> : vector<2x256xf32>
    %104 = tpu.matmul %103, %8, %cst_30 {dimension_numbers = #tpu.dot_dimension_numbers<[1], [0], [0], [1], [0, 0, 1, 1], [], []>} : vector<2x64xbf16>, vector<64x256xbf16>, vector<2x256xf32> -> vector<2x256xf32>
    %105 = arith.addf %102, %104 : vector<2x256xf32>
    %106 = vector.broadcast %cst_12 : f32 to vector<2x256xf32>
    %107 = arith.mulf %105, %106 : vector<2x256xf32>
    %108 = arith.select %14, %105, %107 : vector<2x256xi1>, vector<2x256xf32>
    %109 = math.tanh %108 : vector<2x256xf32>
    %110 = vector.broadcast %cst_12 : f32 to vector<2x256xf32>
    %111 = arith.mulf %109, %110 : vector<2x256xf32>
    %112 = vector.broadcast %cst_12 : f32 to vector<2x256xf32>
    %113 = arith.addf %111, %112 : vector<2x256xf32>
    %114 = arith.select %14, %109, %113 : vector<2x256xi1>, vector<2x256xf32>
    %115 = vector.extract_strided_slice %114 {offsets = [0, 0], sizes = [2, 64], strides = [1, 1]} : vector<2x256xf32> to vector<2x64xf32>
    %116 = vector.extract_strided_slice %114 {offsets = [0, 64], sizes = [2, 64], strides = [1, 1]} : vector<2x256xf32> to vector<2x64xf32>
    %117 = vector.extract_strided_slice %114 {offsets = [0, 128], sizes = [2, 64], strides = [1, 1]} : vector<2x256xf32> to vector<2x64xf32>
    %118 = vector.extract_strided_slice %114 {offsets = [0, 192], sizes = [2, 64], strides = [1, 1]} : vector<2x256xf32> to vector<2x64xf32>
    %119 = arith.mulf %116, %93 : vector<2x64xf32>
    %120 = arith.mulf %115, %117 : vector<2x64xf32>
    %121 = arith.addf %119, %120 : vector<2x64xf32>
    %122 = math.tanh %121 : vector<2x64xf32>
    %123 = arith.mulf %118, %122 : vector<2x64xf32>
    %124 = arith.index_cast %c3_i32 : i32 to index
    %c0_31 = arith.constant 0 : index
    %c0_32 = arith.constant 0 : index
    %125 = vector.load %arg4[%124, %c0_31, %c0_32] : memref<8x2x64xf32, #tpu.memory_space<vmem>>, vector<1x2x64xf32>
    %126 = vector.shape_cast %125 : vector<1x2x64xf32> to vector<2x64xf32>
    %127 = vector.shape_cast %123 : vector<2x64xf32> to vector<1x2x64xf32>
    tpu.vector_store %arg4[%124, %c0_31, %c0_32], %127 {strides = array<i32>} : memref<8x2x64xf32, #tpu.memory_space<vmem>>, vector<1x2x64xf32>,
    %c4_i32 = arith.constant 4 : i32
    %128 = arith.index_cast %c4_i32 : i32 to index
    %c0_33 = arith.constant 0 : index
    %c0_34 = arith.constant 0 : index
    %129 = vector.load %arg5[%128, %c0_33, %c0_34] : memref<8x2x256xf32, #tpu.memory_space<vmem>>, vector<1x2x256xf32>
    %130 = vector.shape_cast %129 : vector<1x2x256xf32> to vector<2x256xf32>
    %131 = arith.truncf %123 : vector<2x64xf32> to vector<2x64xbf16>
    %cst_35 = arith.constant dense<0.000000e+00> : vector<2x256xf32>
    %132 = tpu.matmul %131, %8, %cst_35 {dimension_numbers = #tpu.dot_dimension_numbers<[1], [0], [0], [1], [0, 0, 1, 1], [], []>} : vector<2x64xbf16>, vector<64x256xbf16>, vector<2x256xf32> -> vector<2x256xf32>
    %133 = arith.addf %130, %132 : vector<2x256xf32>
    %134 = vector.broadcast %cst_12 : f32 to vector<2x256xf32>
    %135 = arith.mulf %133, %134 : vector<2x256xf32>
    %136 = arith.select %14, %133, %135 : vector<2x256xi1>, vector<2x256xf32>
    %137 = math.tanh %136 : vector<2x256xf32>
    %138 = vector.broadcast %cst_12 : f32 to vector<2x256xf32>
    %139 = arith.mulf %137, %138 : vector<2x256xf32>
    %140 = vector.broadcast %cst_12 : f32 to vector<2x256xf32>
    %141 = arith.addf %139, %140 : vector<2x256xf32>
    %142 = arith.select %14, %137, %141 : vector<2x256xi1>, vector<2x256xf32>
    %143 = vector.extract_strided_slice %142 {offsets = [0, 0], sizes = [2, 64], strides = [1, 1]} : vector<2x256xf32> to vector<2x64xf32>
    %144 = vector.extract_strided_slice %142 {offsets = [0, 64], sizes = [2, 64], strides = [1, 1]} : vector<2x256xf32> to vector<2x64xf32>
    %145 = vector.extract_strided_slice %142 {offsets = [0, 128], sizes = [2, 64], strides = [1, 1]} : vector<2x256xf32> to vector<2x64xf32>
    %146 = vector.extract_strided_slice %142 {offsets = [0, 192], sizes = [2, 64], strides = [1, 1]} : vector<2x256xf32> to vector<2x64xf32>
    %147 = arith.mulf %144, %121 : vector<2x64xf32>
    %148 = arith.mulf %143, %145 : vector<2x64xf32>
    %149 = arith.addf %147, %148 : vector<2x64xf32>
    %150 = math.tanh %149 : vector<2x64xf32>
    %151 = arith.mulf %146, %150 : vector<2x64xf32>
    %152 = arith.index_cast %c4_i32 : i32 to index
    %c0_36 = arith.constant 0 : index
    %c0_37 = arith.constant 0 : index
    %153 = vector.load %arg4[%152, %c0_36, %c0_37] : memref<8x2x64xf32, #tpu.memory_space<vmem>>, vector<1x2x64xf32>
    %154 = vector.shape_cast %153 : vector<1x2x64xf32> to vector<2x64xf32>
    %155 = vector.shape_cast %151 : vector<2x64xf32> to vector<1x2x64xf32>
    tpu.vector_store %arg4[%152, %c0_36, %c0_37], %155 {strides = array<i32>} : memref<8x2x64xf32, #tpu.memory_space<vmem>>, vector<1x2x64xf32>,
    %c5_i32 = arith.constant 5 : i32
    %156 = arith.index_cast %c5_i32 : i32 to index
    %c0_38 = arith.constant 0 : index
    %c0_39 = arith.constant 0 : index
    %157 = vector.load %arg5[%156, %c0_38, %c0_39] : memref<8x2x256xf32, #tpu.memory_space<vmem>>, vector<1x2x256xf32>
    %158 = vector.shape_cast %157 : vector<1x2x256xf32> to vector<2x256xf32>
    %159 = arith.truncf %151 : vector<2x64xf32> to vector<2x64xbf16>
    %cst_40 = arith.constant dense<0.000000e+00> : vector<2x256xf32>
    %160 = tpu.matmul %159, %8, %cst_40 {dimension_numbers = #tpu.dot_dimension_numbers<[1], [0], [0], [1], [0, 0, 1, 1], [], []>} : vector<2x64xbf16>, vector<64x256xbf16>, vector<2x256xf32> -> vector<2x256xf32>
    %161 = arith.addf %158, %160 : vector<2x256xf32>
    %162 = vector.broadcast %cst_12 : f32 to vector<2x256xf32>
    %163 = arith.mulf %161, %162 : vector<2x256xf32>
    %164 = arith.select %14, %161, %163 : vector<2x256xi1>, vector<2x256xf32>
    %165 = math.tanh %164 : vector<2x256xf32>
    %166 = vector.broadcast %cst_12 : f32 to vector<2x256xf32>
    %167 = arith.mulf %165, %166 : vector<2x256xf32>
    %168 = vector.broadcast %cst_12 : f32 to vector<2x256xf32>
    %169 = arith.addf %167, %168 : vector<2x256xf32>
    %170 = arith.select %14, %165, %169 : vector<2x256xi1>, vector<2x256xf32>
    %171 = vector.extract_strided_slice %170 {offsets = [0, 0], sizes = [2, 64], strides = [1, 1]} : vector<2x256xf32> to vector<2x64xf32>
    %172 = vector.extract_strided_slice %170 {offsets = [0, 64], sizes = [2, 64], strides = [1, 1]} : vector<2x256xf32> to vector<2x64xf32>
    %173 = vector.extract_strided_slice %170 {offsets = [0, 128], sizes = [2, 64], strides = [1, 1]} : vector<2x256xf32> to vector<2x64xf32>
    %174 = vector.extract_strided_slice %170 {offsets = [0, 192], sizes = [2, 64], strides = [1, 1]} : vector<2x256xf32> to vector<2x64xf32>
    %175 = arith.mulf %172, %149 : vector<2x64xf32>
    %176 = arith.mulf %171, %173 : vector<2x64xf32>
    %177 = arith.addf %175, %176 : vector<2x64xf32>
    %178 = math.tanh %177 : vector<2x64xf32>
    %179 = arith.mulf %174, %178 : vector<2x64xf32>
    %180 = arith.index_cast %c5_i32 : i32 to index
    %c0_41 = arith.constant 0 : index
    %c0_42 = arith.constant 0 : index
    %181 = vector.load %arg4[%180, %c0_41, %c0_42] : memref<8x2x64xf32, #tpu.memory_space<vmem>>, vector<1x2x64xf32>
    %182 = vector.shape_cast %181 : vector<1x2x64xf32> to vector<2x64xf32>
    %183 = vector.shape_cast %179 : vector<2x64xf32> to vector<1x2x64xf32>
    tpu.vector_store %arg4[%180, %c0_41, %c0_42], %183 {strides = array<i32>} : memref<8x2x64xf32, #tpu.memory_space<vmem>>, vector<1x2x64xf32>,
    %c6_i32 = arith.constant 6 : i32
    %184 = arith.index_cast %c6_i32 : i32 to index
    %c0_43 = arith.constant 0 : index
    %c0_44 = arith.constant 0 : index
    %185 = vector.load %arg5[%184, %c0_43, %c0_44] : memref<8x2x256xf32, #tpu.memory_space<vmem>>, vector<1x2x256xf32>
    %186 = vector.shape_cast %185 : vector<1x2x256xf32> to vector<2x256xf32>
    %187 = arith.truncf %179 : vector<2x64xf32> to vector<2x64xbf16>
    %cst_45 = arith.constant dense<0.000000e+00> : vector<2x256xf32>
    %188 = tpu.matmul %187, %8, %cst_45 {dimension_numbers = #tpu.dot_dimension_numbers<[1], [0], [0], [1], [0, 0, 1, 1], [], []>} : vector<2x64xbf16>, vector<64x256xbf16>, vector<2x256xf32> -> vector<2x256xf32>
    %189 = arith.addf %186, %188 : vector<2x256xf32>
    %190 = vector.broadcast %cst_12 : f32 to vector<2x256xf32>
    %191 = arith.mulf %189, %190 : vector<2x256xf32>
    %192 = arith.select %14, %189, %191 : vector<2x256xi1>, vector<2x256xf32>
    %193 = math.tanh %192 : vector<2x256xf32>
    %194 = vector.broadcast %cst_12 : f32 to vector<2x256xf32>
    %195 = arith.mulf %193, %194 : vector<2x256xf32>
    %196 = vector.broadcast %cst_12 : f32 to vector<2x256xf32>
    %197 = arith.addf %195, %196 : vector<2x256xf32>
    %198 = arith.select %14, %193, %197 : vector<2x256xi1>, vector<2x256xf32>
    %199 = vector.extract_strided_slice %198 {offsets = [0, 0], sizes = [2, 64], strides = [1, 1]} : vector<2x256xf32> to vector<2x64xf32>
    %200 = vector.extract_strided_slice %198 {offsets = [0, 64], sizes = [2, 64], strides = [1, 1]} : vector<2x256xf32> to vector<2x64xf32>
    %201 = vector.extract_strided_slice %198 {offsets = [0, 128], sizes = [2, 64], strides = [1, 1]} : vector<2x256xf32> to vector<2x64xf32>
    %202 = vector.extract_strided_slice %198 {offsets = [0, 192], sizes = [2, 64], strides = [1, 1]} : vector<2x256xf32> to vector<2x64xf32>
    %203 = arith.mulf %200, %177 : vector<2x64xf32>
    %204 = arith.mulf %199, %201 : vector<2x64xf32>
    %205 = arith.addf %203, %204 : vector<2x64xf32>
    %206 = math.tanh %205 : vector<2x64xf32>
    %207 = arith.mulf %202, %206 : vector<2x64xf32>
    %208 = arith.index_cast %c6_i32 : i32 to index
    %c0_46 = arith.constant 0 : index
    %c0_47 = arith.constant 0 : index
    %209 = vector.load %arg4[%208, %c0_46, %c0_47] : memref<8x2x64xf32, #tpu.memory_space<vmem>>, vector<1x2x64xf32>
    %210 = vector.shape_cast %209 : vector<1x2x64xf32> to vector<2x64xf32>
    %211 = vector.shape_cast %207 : vector<2x64xf32> to vector<1x2x64xf32>
    tpu.vector_store %arg4[%208, %c0_46, %c0_47], %211 {strides = array<i32>} : memref<8x2x64xf32, #tpu.memory_space<vmem>>, vector<1x2x64xf32>,
    %c7_i32 = arith.constant 7 : i32
    %212 = arith.index_cast %c7_i32 : i32 to index
    %c0_48 = arith.constant 0 : index
    %c0_49 = arith.constant 0 : index
    %213 = vector.load %arg5[%212, %c0_48, %c0_49] : memref<8x2x256xf32, #tpu.memory_space<vmem>>, vector<1x2x256xf32>
    %214 = vector.shape_cast %213 : vector<1x2x256xf32> to vector<2x256xf32>
    %215 = arith.truncf %207 : vector<2x64xf32> to vector<2x64xbf16>
    %cst_50 = arith.constant dense<0.000000e+00> : vector<2x256xf32>
    %216 = tpu.matmul %215, %8, %cst_50 {dimension_numbers = #tpu.dot_dimension_numbers<[1], [0], [0], [1], [0, 0, 1, 1], [], []>} : vector<2x64xbf16>, vector<64x256xbf16>, vector<2x256xf32> -> vector<2x256xf32>
    %217 = arith.addf %214, %216 : vector<2x256xf32>
    %218 = vector.broadcast %cst_12 : f32 to vector<2x256xf32>
    %219 = arith.mulf %217, %218 : vector<2x256xf32>
    %220 = arith.select %14, %217, %219 : vector<2x256xi1>, vector<2x256xf32>
    %221 = math.tanh %220 : vector<2x256xf32>
    %222 = vector.broadcast %cst_12 : f32 to vector<2x256xf32>
    %223 = arith.mulf %221, %222 : vector<2x256xf32>
    %224 = vector.broadcast %cst_12 : f32 to vector<2x256xf32>
    %225 = arith.addf %223, %224 : vector<2x256xf32>
    %226 = arith.select %14, %221, %225 : vector<2x256xi1>, vector<2x256xf32>
    %227 = vector.extract_strided_slice %226 {offsets = [0, 0], sizes = [2, 64], strides = [1, 1]} : vector<2x256xf32> to vector<2x64xf32>
    %228 = vector.extract_strided_slice %226 {offsets = [0, 64], sizes = [2, 64], strides = [1, 1]} : vector<2x256xf32> to vector<2x64xf32>
    %229 = vector.extract_strided_slice %226 {offsets = [0, 128], sizes = [2, 64], strides = [1, 1]} : vector<2x256xf32> to vector<2x64xf32>
    %230 = vector.extract_strided_slice %226 {offsets = [0, 192], sizes = [2, 64], strides = [1, 1]} : vector<2x256xf32> to vector<2x64xf32>
    %231 = arith.mulf %228, %205 : vector<2x64xf32>
    %232 = arith.mulf %227, %229 : vector<2x64xf32>
    %233 = arith.addf %231, %232 : vector<2x64xf32>
    %234 = math.tanh %233 : vector<2x64xf32>
    %235 = arith.mulf %230, %234 : vector<2x64xf32>
    %236 = arith.index_cast %c7_i32 : i32 to index
    %c0_51 = arith.constant 0 : index
    %c0_52 = arith.constant 0 : index
    %237 = vector.load %arg4[%236, %c0_51, %c0_52] : memref<8x2x64xf32, #tpu.memory_space<vmem>>, vector<1x2x64xf32>
    %238 = vector.shape_cast %237 : vector<1x2x64xf32> to vector<2x64xf32>
    %239 = vector.shape_cast %235 : vector<2x64xf32> to vector<1x2x64xf32>
    tpu.vector_store %arg4[%236, %c0_51, %c0_52], %239 {strides = array<i32>} : memref<8x2x64xf32, #tpu.memory_space<vmem>>, vector<1x2x64xf32>,
    %c8_i32 = arith.constant 8 : i32
    return
  }
}

</mosaic_0001>

<llo_original>
// kernel: tpu_custom_call.1
$region0: #{tpu_custom_call.1}
  #allocation0 [shape = 'u32[]', space=smem, size = 0x4, offset = 0x4, fixed_abs, tag = 'smem constant byte address 0x4 - core index']
  #allocation1 [shape = 'u32[72,128]{1,0:T(1,128)}', space=vmem, size = 0x9000, scoped, tag = 'internal scratch']
  #allocation2 [shape = 'f32[8,2,256]{2,1,0:T(2,128)}', space=vmem, size = 0x4000, scoped, tag = 'scratch operand']
  %s0 = inlined_call_operand.hbm [shape: bf16[8,2,64], index: 0, kind: input, shape index: {}]
  %s1 = inlined_call_operand.hbm [shape: bf16[64,256], index: 1, kind: input, shape index: {}]
  %s2 = inlined_call_operand.hbm [shape: bf16[64,256], index: 2, kind: input, shape index: {}]
  %s3 = inlined_call_operand.vmem [shape: f32[1,256], index: 3, kind: input, shape index: {}]
  %s4 = inlined_call_operand.hbm [shape: f32[8,2,64], index: 4, kind: output, shape index: {}]
  %s5 = sld [smem:[#allocation0]]
  $region38: #{tpu_custom_call.1} parent=0
    _
  %s7 = ssub.s32 1, %s5
  %s8 = scalar_select 0, %s7, %s5
  $region1: #{tpu_custom_call.1} parent=0
    #allocation3 [shape = 'u8[4096]{0}', space=vmem, size = 0x1000, scoped, tag = 'input window, operand 0, single buffered']
    #allocation4 [shape = 's32[1]{0}', space=sflag, size = 0x4, scoped, tag = 'scoped memory for tpu_custom_call.1']
    #allocation5 [shape = 's32[1]{0}', space=sflag, size = 0x4, scoped, tag = 'scoped memory for tpu_custom_call.1']
    #allocation6 [shape = 'u8[32768]{0}', space=vmem, size = 0x8000, scoped, tag = 'input window, operand 1, single buffered']
    #allocation7 [shape = 's32[1]{0}', space=sflag, size = 0x4, scoped, tag = 'scoped memory for tpu_custom_call.1']
    #allocation8 [shape = 'u8[32768]{0}', space=vmem, size = 0x8000, scoped, tag = 'input window, operand 2, single buffered']
    #allocation9 [shape = 'u8[8192]{0}', space=vmem, size = 0x2000, scoped, tag = 'output window, operand 0, single buffered']
    %9 = vsyncpa [#allocation4], 0
    %10 = vsyncpa [#allocation7], 0
    %11 = vsyncpa [#allocation5], 0
    // Predicated region
    $region2: #{tpu_custom_call.1} parent=1 // pred_check
      _
    $region3: #{tpu_custom_call.1} parent=1 // pred_check_branch
      %13 = sbr.rel (0) target = $region5
    $region4: #{tpu_custom_call.1} parent=1 // pred_region
      %15 = vsyncadd [#allocation4], 0
      %s16 = sshll.u32 %s0, 4
      %s17 = int_to_ptr.hbm [resolvable:$true] %s16
      %s18 = sshll.u32 [#allocation3], 4
      %s19 = int_to_ptr.vmem [resolvable:$true] %s18
      %24 = dma.hbm_to_vmem [thread:$0]  %s17, 128, %s19, [#allocation4], 16, 16, 1
    $region5: #{tpu_custom_call.1} parent=1 // pred_fallthru
      _
    // Predicated region
    $region6: #{tpu_custom_call.1} parent=1 // pred_check
      _
    $region7: #{tpu_custom_call.1} parent=1 // pred_check_branch
      %26 = sbr.rel (0) target = $region9
    $region8: #{tpu_custom_call.1} parent=1 // pred_region
      %28 = vsyncadd [#allocation7], 0
      %s29 = sshll.u32 %s1, 4
      %s30 = int_to_ptr.hbm [resolvable:$true] %s29
      %s31 = sshll.u32 [#allocation6], 4
      %s32 = int_to_ptr.vmem [resolvable:$true] %s31
      %37 = dma.hbm_to_vmem [thread:$0]  %s30, 1024, %s32, [#allocation7], 128, 128, 8
    $region9: #{tpu_custom_call.1} parent=1 // pred_fallthru
      _
    // Predicated region
    $region10: #{tpu_custom_call.1} parent=1 // pred_check
      _
    $region11: #{tpu_custom_call.1} parent=1 // pred_check_branch
      %39 = sbr.rel (0) target = $region13
    $region12: #{tpu_custom_call.1} parent=1 // pred_region
      %41 = vsyncadd [#allocation7], 0
      %s42 = sshll.u32 %s2, 4
      %s43 = int_to_ptr.hbm [resolvable:$true] %s42
      %s44 = sshll.u32 [#allocation8], 4
      %s45 = int_to_ptr.vmem [resolvable:$true] %s44
      %50 = dma.hbm_to_vmem [thread:$0]  %s43, 1024, %s45, [#allocation7], 128, 128, 8
    $region13: #{tpu_custom_call.1} parent=1 // pred_fallthru
      _
    // Predicated region
    $region14: #{tpu_custom_call.1} parent=1 // pred_check
      _
    $region15: #{tpu_custom_call.1} parent=1 // pred_check_branch
      %52 = sbr.rel (0) target = $region17
    $region16: #{tpu_custom_call.1} parent=1 // pred_region
      _
    $region17: #{tpu_custom_call.1} parent=1 // pred_fallthru
      _
    // Predicated region
    $region18: #{tpu_custom_call.1} parent=1 // pred_check
      _
    $region19: #{tpu_custom_call.1} parent=1 // pred_check_branch
      %54 = sbr.rel (0) target = $region21
    $region20: #{tpu_custom_call.1} parent=1 // pred_region
      %56 = dma.done [#allocation4], 128
    $region21: #{tpu_custom_call.1} parent=1 // pred_fallthru
      _
    // Predicated region
    $region22: #{tpu_custom_call.1} parent=1 // pred_check
      _
    $region23: #{tpu_custom_call.1} parent=1 // pred_check_branch
      %58 = sbr.rel (0) target = $region25
    $region24: #{tpu_custom_call.1} parent=1 // pred_region
      %60 = dma.done [#allocation7], 1024
    $region25: #{tpu_custom_call.1} parent=1 // pred_fallthru
      _
    // Predicated region
    $region26: #{tpu_custom_call.1} parent=1 // pred_check
      _
    $region27: #{tpu_custom_call.1} parent=1 // pred_check_branch
      %62 = sbr.rel (0) target = $region29
    $region28: #{tpu_custom_call.1} parent=1 // pred_region
      %64 = dma.done [#allocation7], 1024
    $region29: #{tpu_custom_call.1} parent=1 // pred_fallthru
      _
    %v66 = vld [vmem:[#allocation3] sm:$0x1]
    %v67 = vld [vmem:[#allocation3 + $0x1] sm:$0x1]
    %v68 = vld [vmem:[#allocation3 + $0x2] sm:$0x1]
    %v69 = vld [vmem:[#allocation3 + $0x3] sm:$0x1]
    %v70 = vld [vmem:[#allocation3 + $0x4] sm:$0x1]
    %v71 = vld [vmem:[#allocation3 + $0x5] sm:$0x1]
    %v72 = vld [vmem:[#allocation3 + $0x6] sm:$0x1]
    %v73 = vld [vmem:[#allocation3 + $0x7] sm:$0x1]
    %v74 = vld [vmem:[#allocation6] sm:$0xff]
    %v75 = vld [vmem:[#allocation6 + $0x8] sm:$0xff]
    %v76 = vld [vmem:[#allocation6 + $0x10] sm:$0xff]
    %v77 = vld [vmem:[#allocation6 + $0x18] sm:$0xff]
    %v78 = vld [vmem:[#allocation6 + $0x20] sm:$0xff]
    %v79 = vld [vmem:[#allocation6 + $0x28] sm:$0xff]
    %v80 = vld [vmem:[#allocation6 + $0x30] sm:$0xff]
    %v81 = vld [vmem:[#allocation6 + $0x38] sm:$0xff]
    %v82 = vld [vmem:[%s3] sm:$0x3]
    %v84 = vperm.slane %v82, 0
    %v85 = vperm.slane %v82, 1
    %v86 = vrot.slane %v85, 6
    %vm87 = vcmask 1041408
    %v88 = vsel %vm87, %v84, %v86
    %90 = vst [vmem:[#allocation1] ss:$9 sm:$0xff] %v66
    %s92 = scalar_lea.vmem [#allocation1], 1
    %93 = vst [vmem:[%s92] ss:$9 sm:$0xff] %v67
    %s95 = scalar_lea.vmem [#allocation1], 2
    %96 = vst [vmem:[%s95] ss:$9 sm:$0xff] %v68
    %s98 = scalar_lea.vmem [#allocation1], 3
    %99 = vst [vmem:[%s98] ss:$9 sm:$0xff] %v69
    %s101 = scalar_lea.vmem [#allocation1], 4
    %102 = vst [vmem:[%s101] ss:$9 sm:$0xff] %v70
    %s104 = scalar_lea.vmem [#allocation1], 5
    %105 = vst [vmem:[%s104] ss:$9 sm:$0xff] %v71
    %s107 = scalar_lea.vmem [#allocation1], 6
    %108 = vst [vmem:[%s107] ss:$9 sm:$0xff] %v72
    %s110 = scalar_lea.vmem [#allocation1], 7
    %111 = vst [vmem:[%s110] ss:$9 sm:$0xff] %v73
    %v112 = vld [vmem:[#allocation1] sm:$0xff]
    %v121 = vunpack.c.l.b16 %v74
    %v122 = vunpack.c.h.b16 %v74
    %v123 = vunpack.c.l.b16 %v75
    %v124 = vunpack.c.h.b16 %v75
    %v125 = vunpack.c.l.b16 %v76
    %v126 = vunpack.c.h.b16 %v76
    %v127 = vunpack.c.l.b16 %v77
    %v128 = vunpack.c.h.b16 %v77
    %v129 = vunpack.c.l.b16 %v78
    %v130 = vunpack.c.h.b16 %v78
    %v131 = vunpack.c.l.b16 %v79
    %v132 = vunpack.c.h.b16 %v79
    %v133 = vunpack.c.l.b16 %v80
    %v134 = vunpack.c.h.b16 %v80
    %v135 = vunpack.c.l.b16 %v81
    %v136 = vunpack.c.h.b16 %v81
    %v137 = vpack.c.b16 %v123, %v121
    %v138 = vpack.c.b16 %v124, %v122
    %v139 = vpack.c.b16 %v127, %v125
    %v140 = vpack.c.b16 %v128, %v126
    %v141 = vpack.c.b16 %v131, %v129
    %v142 = vpack.c.b16 %v132, %v130
    %v143 = vpack.c.b16 %v135, %v133
    %v144 = vpack.c.b16 %v136, %v134
    %153 = vst [vmem:[#allocation1] ss:$4 sm:$0xff] %v88
    %s154 = scalar_lea.vmem [#allocation1], 1
    %155 = vst [vmem:[%s154] ss:$4 sm:$0xff] %v88
    %s156 = scalar_lea.vmem [#allocation1], 2
    %157 = vst [vmem:[%s156] ss:$4 sm:$0xff] %v88
    %s158 = scalar_lea.vmem [#allocation1], 3
    %159 = vst [vmem:[%s158] ss:$4 sm:$0xff] %v88
    %s160 = scalar_lea.vmem [#allocation1], 32
    %161 = vst [vmem:[%s160] ss:$4 sm:$0xff] %v88
    %s162 = scalar_lea.vmem [#allocation1], 33
    %163 = vst [vmem:[%s162] ss:$4 sm:$0xff] %v88
    %s164 = scalar_lea.vmem [#allocation1], 34
    %165 = vst [vmem:[%s164] ss:$4 sm:$0xff] %v88
    %s166 = scalar_lea.vmem [#allocation1], 35
    %167 = vst [vmem:[%s166] ss:$4 sm:$0xff] %v88
    %v168 = vld.sshfl [vmem:[#allocation1] sm:$0xff pattern:$0x73625140]
    %v169 = vld.sshfl [vmem:[#allocation1 + $0x8] sm:$0xff pattern:$0x73625140]
    %v170 = vld.sshfl [vmem:[#allocation1 + $0x20] sm:$0xff pattern:$0x73625140]
    %v171 = vld.sshfl [vmem:[#allocation1 + $0x28] sm:$0xff pattern:$0x73625140]
    %vm176 = vcmask 523264
    %v177 = vsel %vm176, %v112, 0
    %179 = vmatpush.bf16.msra.mxu0 0
    %180 = vmatpush.bf16.msra.mxu0 0
    %181 = vmatpush.bf16.msra.mxu0 0
    %182 = vmatpush.bf16.msra.mxu0 0
    %183 = vmatpush.bf16.msra.mxu0 %v143
    %184 = vmatpush.bf16.msra.mxu0 %v141
    %185 = vmatpush.bf16.msra.mxu0 %v139
    %186 = vmatpush.bf16.msra.mxu0 %v137
    %187 = vmatmul.bf16.gmra.mxu0 %v177
    %v188 = vpop.f32.mrf.mxu0
    %v189 = vadd.f32 %v168, %v188
    %v190 = vpop.f32.mrf.mxu0
    %v191 = vadd.f32 %v170, %v190
    %192 = vdwg.mxu0
    %193 = vmatpush.bf16.msra.mxu0 0
    %194 = vmatpush.bf16.msra.mxu0 0
    %195 = vmatpush.bf16.msra.mxu0 0
    %196 = vmatpush.bf16.msra.mxu0 0
    %197 = vmatpush.bf16.msra.mxu0 %v144
    %198 = vmatpush.bf16.msra.mxu0 %v142
    %199 = vmatpush.bf16.msra.mxu0 %v140
    %200 = vmatpush.bf16.msra.mxu0 %v138
    %201 = vmatmul.bf16.gmra.mxu0 %v177
    %v202 = vpop.f32.mrf.mxu0
    %v203 = vadd.f32 %v169, %v202
    %v204 = vpop.f32.mrf.mxu0
    %v205 = vadd.f32 %v171, %v204
    %206 = vdwg.mxu0
    %v211 = vrot.slane %v203, 6
    %v212 = vrot.slane %v205, 6
    %v213 = vsel %vm87, %v189, %v211
    %vm214 = vcmask 1043458
    %v215 = vsel %vm214, %v189, %v211
    %v216 = vrot.slane %v215, 2
    %vm217 = vcmask 1045508
    %v218 = vsel %vm217, %v189, %v211
    %v219 = vrot.slane %v218, 4
    %vm220 = vcmask 1045504
    %v221 = vsel %vm220, %v211, %v189
    %v222 = vrot.slane %v221, 6
    %v223 = vsel %vm87, %v191, %v212
    %v224 = vsel %vm214, %v191, %v212
    %v225 = vrot.slane %v224, 2
    %v226 = vsel %vm217, %v191, %v212
    %v227 = vrot.slane %v226, 4
    %v228 = vsel %vm220, %v212, %v191
    %v229 = vrot.slane %v228, 6
    %238 = vst [vmem:[#allocation2] sm:$0xf] %v213
    %239 = vst [vmem:[#allocation2 + $0x4] sm:$0xf] %v216
    %240 = vst [vmem:[#allocation2 + $0x8] sm:$0xf] %v219
    %241 = vst [vmem:[#allocation2 + $0xc] sm:$0xf] %v222
    %242 = vst [vmem:[#allocation2 + $0x10] sm:$0xf] %v223
    %243 = vst [vmem:[#allocation2 + $0x14] sm:$0xf] %v225
    %244 = vst [vmem:[#allocation2 + $0x18] sm:$0xf] %v227
    %245 = vst [vmem:[#allocation2 + $0x1c] sm:$0xf] %v229
    %v246 = vld [vmem:[#allocation8] sm:$0xff]
    %v247 = vld [vmem:[#allocation8 + $0x8] sm:$0xff]
    %v248 = vld [vmem:[#allocation8 + $0x10] sm:$0xff]
    %v249 = vld [vmem:[#allocation8 + $0x18] sm:$0xff]
    %v250 = vld [vmem:[#allocation8 + $0x20] sm:$0xff]
    %v251 = vld [vmem:[#allocation8 + $0x28] sm:$0xff]
    %v252 = vld [vmem:[#allocation8 + $0x30] sm:$0xff]
    %v253 = vld [vmem:[#allocation8 + $0x38] sm:$0xff]
    %v254 = vlaneseq
    %v255 = vand.u32 %v254, 127
    %v256 = vadd.s32 %v255, 128
    %vm257 = vcmp.ge.s32.totalorder %v255, 128
    %vm258 = vcmp.ge.s32.totalorder %v256, 128
    %vm259 = vcmp.lt.s32.totalorder %v255, 192
    %vm260 = vcmp.lt.s32.totalorder %v256, 192
    %vm261 = vmand %vm257, %vm259
    %vm262 = vmand %vm258, %vm260
    %v263 = vld [vmem:[#allocation2] sm:$0xf]
    %v272 = vunpack.c.l.b16 %v246
    %v273 = vunpack.c.h.b16 %v246
    %v274 = vunpack.c.l.b16 %v247
    %v275 = vunpack.c.h.b16 %v247
    %v276 = vunpack.c.l.b16 %v248
    %v277 = vunpack.c.h.b16 %v248
    %v278 = vunpack.c.l.b16 %v249
    %v279 = vunpack.c.h.b16 %v249
    %v280 = vunpack.c.l.b16 %v250
    %v281 = vunpack.c.h.b16 %v250
    %v282 = vunpack.c.l.b16 %v251
    %v283 = vunpack.c.h.b16 %v251
    %v284 = vunpack.c.l.b16 %v252
    %v285 = vunpack.c.h.b16 %v252
    %v286 = vunpack.c.l.b16 %v253
    %v287 = vunpack.c.h.b16 %v253
    %v288 = vpack.c.b16 %v274, %v272
    %v289 = vpack.c.b16 %v275, %v273
    %v290 = vpack.c.b16 %v278, %v276
    %v291 = vpack.c.b16 %v279, %v277
    %v292 = vpack.c.b16 %v282, %v280
    %v293 = vpack.c.b16 %v283, %v281
    %v294 = vpack.c.b16 %v286, %v284
    %v295 = vpack.c.b16 %v287, %v285
    %v305 = vsel %vm176, 0, 0
    %307 = vmatpush.bf16.msra.mxu0 0
    %308 = vmatpush.bf16.msra.mxu0 0
    %309 = vmatpush.bf16.msra.mxu0 0
    %310 = vmatpush.bf16.msra.mxu0 0
    %311 = vmatpush.bf16.msra.mxu0 %v294
    %312 = vmatpush.bf16.msra.mxu0 %v292
    %313 = vmatpush.bf16.msra.mxu0 %v290
    %314 = vmatpush.bf16.msra.mxu0 %v288
    %315 = vmatmul.bf16.gmra.mxu0 %v305
    %v316 = vpop.f32.mrf.mxu0
    %v317 = vadd.f32 0.0, %v316
    %v318 = vpop.f32.mrf.mxu0
    %319 = vdwg.mxu0
    %320 = vmatpush.bf16.msra.mxu0 0
    %321 = vmatpush.bf16.msra.mxu0 0
    %322 = vmatpush.bf16.msra.mxu0 0
    %323 = vmatpush.bf16.msra.mxu0 0
    %324 = vmatpush.bf16.msra.mxu0 %v295
    %325 = vmatpush.bf16.msra.mxu0 %v293
    %326 = vmatpush.bf16.msra.mxu0 %v291
    %327 = vmatpush.bf16.msra.mxu0 %v289
    %328 = vmatmul.bf16.gmra.mxu0 %v305
    %v329 = vpop.f32.mrf.mxu0
    %v330 = vadd.f32 0.0, %v329
    %v331 = vpop.f32.mrf.mxu0
    %332 = vdwg.mxu0
    %v335 = vrot.slane %v330, 6
    %v336 = vsel %vm87, %v317, %v335
    %v338 = vadd.f32 %v263, %v336
    %v339 = vmul.f32 %v338, 0.5
    %341 = vst [vmem:[#allocation1] ss:$4 sm:$0xff] %v338
    %v342 = vld.sshfl [vmem:[#allocation1] sm:$0xff pattern:$0x73625140]
    %v343 = vld.sshfl [vmem:[#allocation1 + $0x8] sm:$0xff pattern:$0x73625140]
    %347 = vst [vmem:[#allocation1] ss:$4 sm:$0xff] %v339
    %v348 = vld.sshfl [vmem:[#allocation1] sm:$0xff pattern:$0x73625140]
    %v349 = vld.sshfl [vmem:[#allocation1 + $0x8] sm:$0xff pattern:$0x73625140]
    %v352 = vsel %vm261, %v342, %v348
    %v353 = vsel %vm262, %v343, %v349
    %v354 = vtanh.pop %v352
    %v355 = vtanh.pop %v353
    %v356 = vmul.f32 %v354, 0.5
    %v357 = vmul.f32 %v355, 0.5
    %v358 = vadd.f32 %v356, 0.5
    %v359 = vadd.f32 %v357, 0.5
    %v360 = vsel %vm261, %v354, %v358
    %v361 = vsel %vm262, %v355, %v359
    %v362 = vmul.f32 %v360, 0.0
    %v363 = vmul.f32 %v360, %v361
    %365 = vrot.lane.b32.xlu0 %v363, 64
    %v366 = vpop.permute.xlu0 %365
    %v368 = vadd.f32 %v362, %v366
    %v369 = vtanh.pop %v368
    %v370 = vmul.f32 %v361, %v369
    %372 = vrot.lane.b32.xlu0 %v370, 64
    %v373 = vpop.permute.xlu0 %372
    %vm375 = vcmask 517120
    %376 = vst.msk [vmem:[#allocation9] sm:$0x3] %vm375, %v373
    %s377 = scalar_lea.vmem [#allocation2], 4
    %v378 = vld [vmem:[%s377] sm:$0xf]
    %v379 = vpack.c.bf16 %v370, %v370
    %381 = vrot.lane.b32.xlu0 %v379, 64
    %v382 = vpop.permute.xlu0 %381
    %v384 = vsel %vm176, %v382, 0
    %386 = vmatpush.bf16.msra.mxu0 0
    %387 = vmatpush.bf16.msra.mxu0 0
    %388 = vmatpush.bf16.msra.mxu0 0
    %389 = vmatpush.bf16.msra.mxu0 0
    %390 = vmatpush.bf16.msra.mxu0 %v294
    %391 = vmatpush.bf16.msra.mxu0 %v292
    %392 = vmatpush.bf16.msra.mxu0 %v290
    %393 = vmatpush.bf16.msra.mxu0 %v288
    %394 = vmatmul.bf16.gmra.mxu0 %v384
    %v395 = vpop.f32.mrf.mxu0
    %v396 = vadd.f32 0.0, %v395
    %v397 = vpop.f32.mrf.mxu0
    %398 = vdwg.mxu0
    %399 = vmatpush.bf16.msra.mxu0 0
    %400 = vmatpush.bf16.msra.mxu0 0
    %401 = vmatpush.bf16.msra.mxu0 0
    %402 = vmatpush.bf16.msra.mxu0 0
    %403 = vmatpush.bf16.msra.mxu0 %v295
    %404 = vmatpush.bf16.msra.mxu0 %v293
    %405 = vmatpush.bf16.msra.mxu0 %v291
    %406 = vmatpush.bf16.msra.mxu0 %v289
    %407 = vmatmul.bf16.gmra.mxu0 %v384
    %v408 = vpop.f32.mrf.mxu0
    %v409 = vadd.f32 0.0, %v408
    %v410 = vpop.f32.mrf.mxu0
    %411 = vdwg.mxu0
    %v414 = vrot.slane %v409, 6
    %v415 = vsel %vm87, %v396, %v414
    %v417 = vadd.f32 %v378, %v415
    %v418 = vmul.f32 %v417, 0.5
    %420 = vst [vmem:[#allocation1] ss:$4 sm:$0xff] %v417
    %v421 = vld.sshfl [vmem:[#allocation1] sm:$0xff pattern:$0x73625140]
    %v422 = vld.sshfl [vmem:[#allocation1 + $0x8] sm:$0xff pattern:$0x73625140]
    %426 = vst [vmem:[#allocation1] ss:$4 sm:$0xff] %v418
    %v427 = vld.sshfl [vmem:[#allocation1] sm:$0xff pattern:$0x73625140]
    %v428 = vld.sshfl [vmem:[#allocation1 + $0x8] sm:$0xff pattern:$0x73625140]
    %v431 = vsel %vm261, %v421, %v427
    %v432 = vsel %vm262, %v422, %v428
    %v433 = vtanh.pop %v431
    %v434 = vtanh.pop %v432
    %v435 = vmul.f32 %v433, 0.5
    %v436 = vmul.f32 %v434, 0.5
    %v437 = vadd.f32 %v435, 0.5
    %v438 = vadd.f32 %v436, 0.5
    %v439 = vsel %vm261, %v433, %v437
    %v440 = vsel %vm262, %v434, %v438
    %v441 = vmul.f32 %v439, %v368
    %v442 = vmul.f32 %v439, %v440
    %444 = vrot.lane.b32.xlu0 %v442, 64
    %v445 = vpop.permute.xlu0 %444
    %v447 = vadd.f32 %v441, %v445
    %v448 = vtanh.pop %v447
    %v449 = vmul.f32 %v440, %v448
    %451 = vrot.lane.b32.xlu0 %v449, 64
    %v452 = vpop.permute.xlu0 %451
    %s454 = scalar_lea.vmem [#allocation9], 2
    %455 = vst.msk [vmem:[%s454] sm:$0x3] %vm375, %v452
    %s456 = scalar_lea.vmem [#allocation2], 8
    %v457 = vld [vmem:[%s456] sm:$0xf]
    %v458 = vpack.c.bf16 %v449, %v449
    %460 = vrot.lane.b32.xlu0 %v458, 64
    %v461 = vpop.permute.xlu0 %460
    %v463 = vsel %vm176, %v461, 0
    %465 = vmatpush.bf16.msra.mxu0 0
    %466 = vmatpush.bf16.msra.mxu0 0
    %467 = vmatpush.bf16.msra.mxu0 0
    %468 = vmatpush.bf16.msra.mxu0 0
    %469 = vmatpush.bf16.msra.mxu0 %v294
    %470 = vmatpush.bf16.msra.mxu0 %v292
    %471 = vmatpush.bf16.msra.mxu0 %v290
    %472 = vmatpush.bf16.msra.mxu0 %v288
    %473 = vmatmul.bf16.gmra.mxu0 %v463
    %v474 = vpop.f32.mrf.mxu0
    %v475 = vadd.f32 0.0, %v474
    %v476 = vpop.f32.mrf.mxu0
    %477 = vdwg.mxu0
    %478 = vmatpush.bf16.msra.mxu0 0
    %479 = vmatpush.bf16.msra.mxu0 0
    %480 = vmatpush.bf16.msra.mxu0 0
    %481 = vmatpush.bf16.msra.mxu0 0
    %482 = vmatpush.bf16.msra.mxu0 %v295
    %483 = vmatpush.bf16.msra.mxu0 %v293
    %484 = vmatpush.bf16.msra.mxu0 %v291
    %485 = vmatpush.bf16.msra.mxu0 %v289
    %486 = vmatmul.bf16.gmra.mxu0 %v463
    %v487 = vpop.f32.mrf.mxu0
    %v488 = vadd.f32 0.0, %v487
    %v489 = vpop.f32.mrf.mxu0
    %490 = vdwg.mxu0
    %v493 = vrot.slane %v488, 6
    %v494 = vsel %vm87, %v475, %v493
    %v496 = vadd.f32 %v457, %v494
    %v497 = vmul.f32 %v496, 0.5
    %499 = vst [vmem:[#allocation1] ss:$4 sm:$0xff] %v496
    %v500 = vld.sshfl [vmem:[#allocation1] sm:$0xff pattern:$0x73625140]
    %v501 = vld.sshfl [vmem:[#allocation1 + $0x8] sm:$0xff pattern:$0x73625140]
    %505 = vst [vmem:[#allocation1] ss:$4 sm:$0xff] %v497
    %v506 = vld.sshfl [vmem:[#allocation1] sm:$0xff pattern:$0x73625140]
    %v507 = vld.sshfl [vmem:[#allocation1 + $0x8] sm:$0xff pattern:$0x73625140]
    %v510 = vsel %vm261, %v500, %v506
    %v511 = vsel %vm262, %v501, %v507
    %v512 = vtanh.pop %v510
    %v513 = vtanh.pop %v511
    %v514 = vmul.f32 %v512, 0.5
    %v515 = vmul.f32 %v513, 0.5
    %v516 = vadd.f32 %v514, 0.5
    %v517 = vadd.f32 %v515, 0.5
    %v518 = vsel %vm261, %v512, %v516
    %v519 = vsel %vm262, %v513, %v517
    %v520 = vmul.f32 %v518, %v447
    %v521 = vmul.f32 %v518, %v519
    %523 = vrot.lane.b32.xlu0 %v521, 64
    %v524 = vpop.permute.xlu0 %523
    %v526 = vadd.f32 %v520, %v524
    %v527 = vtanh.pop %v526
    %v528 = vmul.f32 %v519, %v527
    %530 = vrot.lane.b32.xlu0 %v528, 64
    %v531 = vpop.permute.xlu0 %530
    %s533 = scalar_lea.vmem [#allocation9], 4
    %534 = vst.msk [vmem:[%s533] sm:$0x3] %vm375, %v531
    %s535 = scalar_lea.vmem [#allocation2], 12
    %v536 = vld [vmem:[%s535] sm:$0xf]
    %v537 = vpack.c.bf16 %v528, %v528
    %539 = vrot.lane.b32.xlu0 %v537, 64
    %v540 = vpop.permute.xlu0 %539
    %v542 = vsel %vm176, %v540, 0
    %544 = vmatpush.bf16.msra.mxu0 0
    %545 = vmatpush.bf16.msra.mxu0 0
    %546 = vmatpush.bf16.msra.mxu0 0
    %547 = vmatpush.bf16.msra.mxu0 0
    %548 = vmatpush.bf16.msra.mxu0 %v294
    %549 = vmatpush.bf16.msra.mxu0 %v292
    %550 = vmatpush.bf16.msra.mxu0 %v290
    %551 = vmatpush.bf16.msra.mxu0 %v288
    %552 = vmatmul.bf16.gmra.mxu0 %v542
    %v553 = vpop.f32.mrf.mxu0
    %v554 = vadd.f32 0.0, %v553
    %v555 = vpop.f32.mrf.mxu0
    %556 = vdwg.mxu0
    %557 = vmatpush.bf16.msra.mxu0 0
    %558 = vmatpush.bf16.msra.mxu0 0
    %559 = vmatpush.bf16.msra.mxu0 0
    %560 = vmatpush.bf16.msra.mxu0 0
    %561 = vmatpush.bf16.msra.mxu0 %v295
    %562 = vmatpush.bf16.msra.mxu0 %v293
    %563 = vmatpush.bf16.msra.mxu0 %v291
    %564 = vmatpush.bf16.msra.mxu0 %v289
    %565 = vmatmul.bf16.gmra.mxu0 %v542
    %v566 = vpop.f32.mrf.mxu0
    %v567 = vadd.f32 0.0, %v566
    %v568 = vpop.f32.mrf.mxu0
    %569 = vdwg.mxu0
    %v572 = vrot.slane %v567, 6
    %v573 = vsel %vm87, %v554, %v572
    %v575 = vadd.f32 %v536, %v573
    %v576 = vmul.f32 %v575, 0.5
    %578 = vst [vmem:[#allocation1] ss:$4 sm:$0xff] %v575
    %v579 = vld.sshfl [vmem:[#allocation1] sm:$0xff pattern:$0x73625140]
    %v580 = vld.sshfl [vmem:[#allocation1 + $0x8] sm:$0xff pattern:$0x73625140]
    %584 = vst [vmem:[#allocation1] ss:$4 sm:$0xff] %v576
    %v585 = vld.sshfl [vmem:[#allocation1] sm:$0xff pattern:$0x73625140]
    %v586 = vld.sshfl [vmem:[#allocation1 + $0x8] sm:$0xff pattern:$0x73625140]
    %v589 = vsel %vm261, %v579, %v585
    %v590 = vsel %vm262, %v580, %v586
    %v591 = vtanh.pop %v589
    %v592 = vtanh.pop %v590
    %v593 = vmul.f32 %v591, 0.5
    %v594 = vmul.f32 %v592, 0.5
    %v595 = vadd.f32 %v593, 0.5
    %v596 = vadd.f32 %v594, 0.5
    %v597 = vsel %vm261, %v591, %v595
    %v598 = vsel %vm262, %v592, %v596
    %v599 = vmul.f32 %v597, %v526
    %v600 = vmul.f32 %v597, %v598
    %602 = vrot.lane.b32.xlu0 %v600, 64
    %v603 = vpop.permute.xlu0 %602
    %v605 = vadd.f32 %v599, %v603
    %v606 = vtanh.pop %v605
    %v607 = vmul.f32 %v598, %v606
    %609 = vrot.lane.b32.xlu0 %v607, 64
    %v610 = vpop.permute.xlu0 %609
    %s612 = scalar_lea.vmem [#allocation9], 6
    %613 = vst.msk [vmem:[%s612] sm:$0x3] %vm375, %v610
    %s614 = scalar_lea.vmem [#allocation2], 16
    %v615 = vld [vmem:[%s614] sm:$0xf]
    %v616 = vpack.c.bf16 %v607, %v607
    %618 = vrot.lane.b32.xlu0 %v616, 64
    %v619 = vpop.permute.xlu0 %618
    %v621 = vsel %vm176, %v619, 0
    %623 = vmatpush.bf16.msra.mxu0 0
    %624 = vmatpush.bf16.msra.mxu0 0
    %625 = vmatpush.bf16.msra.mxu0 0
    %626 = vmatpush.bf16.msra.mxu0 0
    %627 = vmatpush.bf16.msra.mxu0 %v294
    %628 = vmatpush.bf16.msra.mxu0 %v292
    %629 = vmatpush.bf16.msra.mxu0 %v290
    %630 = vmatpush.bf16.msra.mxu0 %v288
    %631 = vmatmul.bf16.gmra.mxu0 %v621
    %v632 = vpop.f32.mrf.mxu0
    %v633 = vadd.f32 0.0, %v632
    %v634 = vpop.f32.mrf.mxu0
    %635 = vdwg.mxu0
    %636 = vmatpush.bf16.msra.mxu0 0
    %637 = vmatpush.bf16.msra.mxu0 0
    %638 = vmatpush.bf16.msra.mxu0 0
    %639 = vmatpush.bf16.msra.mxu0 0
    %640 = vmatpush.bf16.msra.mxu0 %v295
    %641 = vmatpush.bf16.msra.mxu0 %v293
    %642 = vmatpush.bf16.msra.mxu0 %v291
    %643 = vmatpush.bf16.msra.mxu0 %v289
    %644 = vmatmul.bf16.gmra.mxu0 %v621
    %v645 = vpop.f32.mrf.mxu0
    %v646 = vadd.f32 0.0, %v645
    %v647 = vpop.f32.mrf.mxu0
    %648 = vdwg.mxu0
    %v651 = vrot.slane %v646, 6
    %v652 = vsel %vm87, %v633, %v651
    %v654 = vadd.f32 %v615, %v652
    %v655 = vmul.f32 %v654, 0.5
    %657 = vst [vmem:[#allocation1] ss:$4 sm:$0xff] %v654
    %v658 = vld.sshfl [vmem:[#allocation1] sm:$0xff pattern:$0x73625140]
    %v659 = vld.sshfl [vmem:[#allocation1 + $0x8] sm:$0xff pattern:$0x73625140]
    %663 = vst [vmem:[#allocation1] ss:$4 sm:$0xff] %v655
    %v664 = vld.sshfl [vmem:[#allocation1] sm:$0xff pattern:$0x73625140]
    %v665 = vld.sshfl [vmem:[#allocation1 + $0x8] sm:$0xff pattern:$0x73625140]
    %v668 = vsel %vm261, %v658, %v664
    %v669 = vsel %vm262, %v659, %v665
    %v670 = vtanh.pop %v668
    %v671 = vtanh.pop %v669
    %v672 = vmul.f32 %v670, 0.5
    %v673 = vmul.f32 %v671, 0.5
    %v674 = vadd.f32 %v672, 0.5
    %v675 = vadd.f32 %v673, 0.5
    %v676 = vsel %vm261, %v670, %v674
    %v677 = vsel %vm262, %v671, %v675
    %v678 = vmul.f32 %v676, %v605
    %v679 = vmul.f32 %v676, %v677
    %681 = vrot.lane.b32.xlu0 %v679, 64
    %v682 = vpop.permute.xlu0 %681
    %v684 = vadd.f32 %v678, %v682
    %v685 = vtanh.pop %v684
    %v686 = vmul.f32 %v677, %v685
    %688 = vrot.lane.b32.xlu0 %v686, 64
    %v689 = vpop.permute.xlu0 %688
    %s691 = scalar_lea.vmem [#allocation9], 8
    %692 = vst.msk [vmem:[%s691] sm:$0x3] %vm375, %v689
    %s693 = scalar_lea.vmem [#allocation2], 20
    %v694 = vld [vmem:[%s693] sm:$0xf]
    %v695 = vpack.c.bf16 %v686, %v686
    %697 = vrot.lane.b32.xlu0 %v695, 64
    %v698 = vpop.permute.xlu0 %697
    %v700 = vsel %vm176, %v698, 0
    %702 = vmatpush.bf16.msra.mxu0 0
    %703 = vmatpush.bf16.msra.mxu0 0
    %704 = vmatpush.bf16.msra.mxu0 0
    %705 = vmatpush.bf16.msra.mxu0 0
    %706 = vmatpush.bf16.msra.mxu0 %v294
    %707 = vmatpush.bf16.msra.mxu0 %v292
    %708 = vmatpush.bf16.msra.mxu0 %v290
    %709 = vmatpush.bf16.msra.mxu0 %v288
    %710 = vmatmul.bf16.gmra.mxu0 %v700
    %v711 = vpop.f32.mrf.mxu0
    %v712 = vadd.f32 0.0, %v711
    %v713 = vpop.f32.mrf.mxu0
    %714 = vdwg.mxu0
    %715 = vmatpush.bf16.msra.mxu0 0
    %716 = vmatpush.bf16.msra.mxu0 0
    %717 = vmatpush.bf16.msra.mxu0 0
    %718 = vmatpush.bf16.msra.mxu0 0
    %719 = vmatpush.bf16.msra.mxu0 %v295
    %720 = vmatpush.bf16.msra.mxu0 %v293
    %721 = vmatpush.bf16.msra.mxu0 %v291
    %722 = vmatpush.bf16.msra.mxu0 %v289
    %723 = vmatmul.bf16.gmra.mxu0 %v700
    %v724 = vpop.f32.mrf.mxu0
    %v725 = vadd.f32 0.0, %v724
    %v726 = vpop.f32.mrf.mxu0
    %727 = vdwg.mxu0
    %v730 = vrot.slane %v725, 6
    %v731 = vsel %vm87, %v712, %v730
    %v733 = vadd.f32 %v694, %v731
    %v734 = vmul.f32 %v733, 0.5
    %736 = vst [vmem:[#allocation1] ss:$4 sm:$0xff] %v733
    %v737 = vld.sshfl [vmem:[#allocation1] sm:$0xff pattern:$0x73625140]
    %v738 = vld.sshfl [vmem:[#allocation1 + $0x8] sm:$0xff pattern:$0x73625140]
    %742 = vst [vmem:[#allocation1] ss:$4 sm:$0xff] %v734
    %v743 = vld.sshfl [vmem:[#allocation1] sm:$0xff pattern:$0x73625140]
    %v744 = vld.sshfl [vmem:[#allocation1 + $0x8] sm:$0xff pattern:$0x73625140]
    %v747 = vsel %vm261, %v737, %v743
    %v748 = vsel %vm262, %v738, %v744
    %v749 = vtanh.pop %v747
    %v750 = vtanh.pop %v748
    %v751 = vmul.f32 %v749, 0.5
    %v752 = vmul.f32 %v750, 0.5
    %v753 = vadd.f32 %v751, 0.5
    %v754 = vadd.f32 %v752, 0.5
    %v755 = vsel %vm261, %v749, %v753
    %v756 = vsel %vm262, %v750, %v754
    %v757 = vmul.f32 %v755, %v684
    %v758 = vmul.f32 %v755, %v756
    %760 = vrot.lane.b32.xlu0 %v758, 64
    %v761 = vpop.permute.xlu0 %760
    %v763 = vadd.f32 %v757, %v761
    %v764 = vtanh.pop %v763
    %v765 = vmul.f32 %v756, %v764
    %767 = vrot.lane.b32.xlu0 %v765, 64
    %v768 = vpop.permute.xlu0 %767
    %s770 = scalar_lea.vmem [#allocation9], 10
    %771 = vst.msk [vmem:[%s770] sm:$0x3] %vm375, %v768
    %s772 = scalar_lea.vmem [#allocation2], 24
    %v773 = vld [vmem:[%s772] sm:$0xf]
    %v774 = vpack.c.bf16 %v765, %v765
    %776 = vrot.lane.b32.xlu0 %v774, 64
    %v777 = vpop.permute.xlu0 %776
    %v779 = vsel %vm176, %v777, 0
    %781 = vmatpush.bf16.msra.mxu0 0
    %782 = vmatpush.bf16.msra.mxu0 0
    %783 = vmatpush.bf16.msra.mxu0 0
    %784 = vmatpush.bf16.msra.mxu0 0
    %785 = vmatpush.bf16.msra.mxu0 %v294
    %786 = vmatpush.bf16.msra.mxu0 %v292
    %787 = vmatpush.bf16.msra.mxu0 %v290
    %788 = vmatpush.bf16.msra.mxu0 %v288
    %789 = vmatmul.bf16.gmra.mxu0 %v779
    %v790 = vpop.f32.mrf.mxu0
    %v791 = vadd.f32 0.0, %v790
    %v792 = vpop.f32.mrf.mxu0
    %793 = vdwg.mxu0
    %794 = vmatpush.bf16.msra.mxu0 0
    %795 = vmatpush.bf16.msra.mxu0 0
    %796 = vmatpush.bf16.msra.mxu0 0
    %797 = vmatpush.bf16.msra.mxu0 0
    %798 = vmatpush.bf16.msra.mxu0 %v295
    %799 = vmatpush.bf16.msra.mxu0 %v293
    %800 = vmatpush.bf16.msra.mxu0 %v291
    %801 = vmatpush.bf16.msra.mxu0 %v289
    %802 = vmatmul.bf16.gmra.mxu0 %v779
    %v803 = vpop.f32.mrf.mxu0
    %v804 = vadd.f32 0.0, %v803
    %v805 = vpop.f32.mrf.mxu0
    %806 = vdwg.mxu0
    %v809 = vrot.slane %v804, 6
    %v810 = vsel %vm87, %v791, %v809
    %v812 = vadd.f32 %v773, %v810
    %v813 = vmul.f32 %v812, 0.5
    %815 = vst [vmem:[#allocation1] ss:$4 sm:$0xff] %v812
    %v816 = vld.sshfl [vmem:[#allocation1] sm:$0xff pattern:$0x73625140]
    %v817 = vld.sshfl [vmem:[#allocation1 + $0x8] sm:$0xff pattern:$0x73625140]
    %821 = vst [vmem:[#allocation1] ss:$4 sm:$0xff] %v813
    %v822 = vld.sshfl [vmem:[#allocation1] sm:$0xff pattern:$0x73625140]
    %v823 = vld.sshfl [vmem:[#allocation1 + $0x8] sm:$0xff pattern:$0x73625140]
    %v826 = vsel %vm261, %v816, %v822
    %v827 = vsel %vm262, %v817, %v823
    %v828 = vtanh.pop %v826
    %v829 = vtanh.pop %v827
    %v830 = vmul.f32 %v828, 0.5
    %v831 = vmul.f32 %v829, 0.5
    %v832 = vadd.f32 %v830, 0.5
    %v833 = vadd.f32 %v831, 0.5
    %v834 = vsel %vm261, %v828, %v832
    %v835 = vsel %vm262, %v829, %v833
    %v836 = vmul.f32 %v834, %v763
    %v837 = vmul.f32 %v834, %v835
    %839 = vrot.lane.b32.xlu0 %v837, 64
    %v840 = vpop.permute.xlu0 %839
    %v842 = vadd.f32 %v836, %v840
    %v843 = vtanh.pop %v842
    %v844 = vmul.f32 %v835, %v843
    %846 = vrot.lane.b32.xlu0 %v844, 64
    %v847 = vpop.permute.xlu0 %846
    %s849 = scalar_lea.vmem [#allocation9], 12
    %850 = vst.msk [vmem:[%s849] sm:$0x3] %vm375, %v847
    %s851 = scalar_lea.vmem [#allocation2], 28
    %v852 = vld [vmem:[%s851] sm:$0xf]
    %v853 = vpack.c.bf16 %v844, %v844
    %855 = vrot.lane.b32.xlu0 %v853, 64
    %v856 = vpop.permute.xlu0 %855
    %v858 = vsel %vm176, %v856, 0
    %860 = vmatpush.bf16.msra.mxu0 0
    %861 = vmatpush.bf16.msra.mxu0 0
    %862 = vmatpush.bf16.msra.mxu0 0
    %863 = vmatpush.bf16.msra.mxu0 0
    %864 = vmatpush.bf16.msra.mxu0 %v294
    %865 = vmatpush.bf16.msra.mxu0 %v292
    %866 = vmatpush.bf16.msra.mxu0 %v290
    %867 = vmatpush.bf16.msra.mxu0 %v288
    %868 = vmatmul.bf16.gmra.mxu0 %v858
    %v869 = vpop.f32.mrf.mxu0
    %v870 = vadd.f32 0.0, %v869
    %v871 = vpop.f32.mrf.mxu0
    %872 = vdwg.mxu0
    %873 = vmatpush.bf16.msra.mxu0 0
    %874 = vmatpush.bf16.msra.mxu0 0
    %875 = vmatpush.bf16.msra.mxu0 0
    %876 = vmatpush.bf16.msra.mxu0 0
    %877 = vmatpush.bf16.msra.mxu0 %v295
    %878 = vmatpush.bf16.msra.mxu0 %v293
    %879 = vmatpush.bf16.msra.mxu0 %v291
    %880 = vmatpush.bf16.msra.mxu0 %v289
    %881 = vmatmul.bf16.gmra.mxu0 %v858
    %v882 = vpop.f32.mrf.mxu0
    %v883 = vadd.f32 0.0, %v882
    %v884 = vpop.f32.mrf.mxu0
    %885 = vdwg.mxu0
    %v888 = vrot.slane %v883, 6
    %v889 = vsel %vm87, %v870, %v888
    %v891 = vadd.f32 %v852, %v889
    %v892 = vmul.f32 %v891, 0.5
    %894 = vst [vmem:[#allocation1] ss:$4 sm:$0xff] %v891
    %v895 = vld.sshfl [vmem:[#allocation1] sm:$0xff pattern:$0x73625140]
    %v896 = vld.sshfl [vmem:[#allocation1 + $0x8] sm:$0xff pattern:$0x73625140]
    %900 = vst [vmem:[#allocation1] ss:$4 sm:$0xff] %v892
    %v901 = vld.sshfl [vmem:[#allocation1] sm:$0xff pattern:$0x73625140]
    %v902 = vld.sshfl [vmem:[#allocation1 + $0x8] sm:$0xff pattern:$0x73625140]
    %v905 = vsel %vm261, %v895, %v901
    %v906 = vsel %vm262, %v896, %v902
    %v907 = vtanh.pop %v905
    %v908 = vtanh.pop %v906
    %v909 = vmul.f32 %v907, 0.5
    %v910 = vmul.f32 %v908, 0.5
    %v911 = vadd.f32 %v909, 0.5
    %v912 = vadd.f32 %v910, 0.5
    %v913 = vsel %vm261, %v907, %v911
    %v914 = vsel %vm262, %v908, %v912
    %v915 = vmul.f32 %v913, %v842
    %v916 = vmul.f32 %v913, %v914
    %918 = vrot.lane.b32.xlu0 %v916, 64
    %v919 = vpop.permute.xlu0 %918
    %v921 = vadd.f32 %v915, %v919
    %v922 = vtanh.pop %v921
    %v923 = vmul.f32 %v914, %v922
    %925 = vrot.lane.b32.xlu0 %v923, 64
    %v926 = vpop.permute.xlu0 %925
    %s928 = scalar_lea.vmem [#allocation9], 14
    %929 = vst.msk [vmem:[%s928] sm:$0x3] %vm375, %v926
    // Predicated region
    $region30: #{tpu_custom_call.1} parent=1 // pred_check
      _
    $region31: #{tpu_custom_call.1} parent=1 // pred_check_branch
      %931 = sbr.rel (0) target = $region33
    $region32: #{tpu_custom_call.1} parent=1 // pred_region
      %933 = vsyncadd [#allocation5], 0
      %s934 = sshll.u32 [#allocation9], 4
      %s935 = int_to_ptr.vmem [resolvable:$true] %s934
      %s936 = sshll.u32 %s4, 4
      %s937 = int_to_ptr.hbm [resolvable:$true] %s936
      %942 = dma.vmem_to_hbm [thread:$0]  %s935, 256, %s937, [#allocation5], 32, 32, 2
    $region33: #{tpu_custom_call.1} parent=1 // pred_fallthru
      _
    // Predicated region
    $region34: #{tpu_custom_call.1} parent=1 // pred_check
      _
    $region35: #{tpu_custom_call.1} parent=1 // pred_check_branch
      %944 = sbr.rel (0) target = $region37
    $region36: #{tpu_custom_call.1} parent=1 // pred_region
      %946 = dma.done [#allocation5], 256
    $region37: #{tpu_custom_call.1} parent=1 // pred_fallthru
      _
    %947 = vsyncpa [#allocation4], 1
    %948 = vsyncpa [#allocation7], 1
    %949 = vsyncpa [#allocation5], 1

</llo_original>
